<compile_context>
chip_gen: v7x
topology: tpu7x:2x2x1
jax: 0.10.0
libtpu: 0.0.40
codegen_flags: <defaults>
</compile_context>

<pallas_src>
import functools

import jax
import jax.numpy as jnp
from jax.experimental import pallas as pl
from jax.experimental.pallas import tpu as pltpu


def _round_up(x, m):
    return (x + m - 1) // m * m


def _tile_bytes(shape, itemsize):
    """Approximate VMEM footprint of one block, honoring (8, 128) layout padding."""
    s = list(shape)
    if len(s) >= 1:
        s[-1] = _round_up(s[-1], 128)
    if len(s) >= 2:
        s[-2] = _round_up(s[-2], 8)
    n = 1
    for d in s:
        n *= d
    return n * itemsize


def _vmem_limit(block_bytes):
    # Double-buffered pipeline blocks + headroom for compiler-internal scratch.
    est = 2 * sum(block_bytes) + (8 << 20)
    return int(min(max(est, 32 << 20), 64 << 20))  # 64 MiB cap = v7x physical VMEM.


# --------------------------------------------------------------------------------------
# Primary path: in-kernel 3x3 taps on a halo'd NHWC row window (zero HBM expansion).
# --------------------------------------------------------------------------------------
def _conv3x3_tap_kernel(x_ref, w_ref, scale_ref, shift_ref, o_ref, *, th, ww, cin, cout):
    """One (sample, row-block) of 3x3 'same' conv + BN affine + ReLU.

    x_ref:     (1, H+2, W+2, Cin) bf16   whole spatially padded image of sample n
                                         (index_map depends only on n -> DMA'd once/sample)
    w_ref:     (9, Cin, Cout)     bf16   taps, t = 3*kh + kw
    scale_ref: (1, Cout)          f32    gamma / sqrt(running_var + eps)
    shift_ref: (1, Cout)          f32    (conv_bias - running_mean) * scale + beta
    o_ref:     (1, TH, W, Cout)   f32
    """
    hb = pl.program_id(1)
    h0 = pl.multiple_of(hb * th, th)             # top row of this output block (padded coords)
    acc = jnp.zeros((th * ww, cout), jnp.float32)
    for kh in range(3):
        for kw in range(3):
            # Halo'd window read: dynamic row offset (untiled dim), static column offset.
            patch = x_ref[0, pl.ds(h0 + kh, th), pl.ds(kw, ww), :]      # (TH, W, Cin)
            acc = acc + jnp.dot(patch.reshape(th * ww, cin), w_ref[3 * kh + kw],
                                preferred_element_type=jnp.float32)
    out = jnp.maximum(acc * scale_ref[...] + shift_ref[...], 0.0)
    o_ref[...] = out.reshape(1, th, ww, cout).astype(o_ref.dtype)


def _conv_tap_path(x_nhwc, w_taps, scale_p, shift_p, cout_blk, row_tile):
    N, H, W, Cin = x_nhwc.shape
    Cout = w_taps.shape[-1]

    x_pad = jnp.pad(x_nhwc, ((0, 0), (1, 1), (1, 1), (0, 0))).astype(jnp.bfloat16)
    w9 = jnp.pad(w_taps.reshape(9, Cin, Cout),
                 ((0, 0), (0, 0), (0, cout_blk - Cout))).astype(jnp.bfloat16)

    # ~row_tile output pixels per grid step; TH must divide H.
    th = min(H, max(1, row_tile // W))
    while H % th:
        th -= 1
    n_hblk = H // th

    kern = functools.partial(_conv3x3_tap_kernel, th=th, ww=W, cin=Cin, cout=cout_blk)

    vmem = _vmem_limit([
        _tile_bytes((1, H + 2, W + 2, Cin), 2),      # resident padded image (bf16)
        _tile_bytes((9, Cin, cout_blk), 2),          # weights (bf16)
        2 * _tile_bytes((1, cout_blk), 4),           # scale + shift
        _tile_bytes((1, th, W, cout_blk), 4),        # output block (f32)
    ])

    return pl.pallas_call(
        kern,
        out_shape=jax.ShapeDtypeStruct((N, H, W, cout_blk), jnp.float32),
        grid=(N, n_hblk),
        in_specs=[
            pl.BlockSpec((1, H + 2, W + 2, Cin), lambda n, j: (n, 0, 0, 0)),
            pl.BlockSpec((9, Cin, cout_blk), lambda n, j: (0, 0, 0)),
            pl.BlockSpec((1, cout_blk), lambda n, j: (0, 0)),
            pl.BlockSpec((1, cout_blk), lambda n, j: (0, 0)),
        ],
        out_specs=pl.BlockSpec((1, th, W, cout_blk), lambda n, j: (n, j, 0, 0)),
        compiler_params=pltpu.CompilerParams(
            dimension_semantics=("parallel", "arbitrary"),
            vmem_limit_bytes=vmem),
    )(x_pad, w9, scale_p, shift_p)


# --------------------------------------------------------------------------------------
# Fallback path (tiny Cin, or W not a multiple of 8): wrapper im2col -> one big GEMM.
# --------------------------------------------------------------------------------------
def _gemm_affine_relu_kernel(x_ref, w_ref, scale_ref, shift_ref, o_ref):
    """x_ref (TM, 9*Cin) bf16, w_ref (9*Cin, Cout) bf16, scale/shift (1, Cout) f32."""
    acc = jnp.dot(x_ref[...], w_ref[...], preferred_element_type=jnp.float32)
    o_ref[...] = jnp.maximum(acc * scale_ref[...] + shift_ref[...], 0.0).astype(o_ref.dtype)


def _conv_im2col_path(x_nhwc, w_taps, scale_p, shift_p, cout_blk, row_tile):
    N, H, W, Cin = x_nhwc.shape
    Cout = w_taps.shape[-1]
    K = 9 * Cin
    R = N * H * W

    x_halo = jnp.pad(x_nhwc, ((0, 0), (1, 1), (1, 1), (0, 0)))
    patches = [x_halo[:, kh:kh + H, kw:kw + W, :] for kh in range(3) for kw in range(3)]
    # NOTE: K is NOT zero-padded to 128 in HBM (block last dim == full array dim is legal);
    # lane padding only happens inside VMEM.
    x_col = jnp.concatenate(patches, axis=-1).reshape(R, K).astype(jnp.bfloat16)

    w2 = jnp.pad(w_taps.reshape(K, Cout),
                 ((0, 0), (0, cout_blk - Cout))).astype(jnp.bfloat16)

    tm = min(_round_up(row_tile, 8), _round_up(R, 8))
    r_pad = _round_up(R, tm)
    if r_pad != R:
        x_col = jnp.pad(x_col, ((0, r_pad - R), (0, 0)))

    vmem = _vmem_limit([
        _tile_bytes((tm, K), 2),
        _tile_bytes((K, cout_blk), 2),
        2 * _tile_bytes((1, cout_blk), 4),
        _tile_bytes((tm, cout_blk), 4),
    ])

    out_flat = pl.pallas_call(
        _gemm_affine_relu_kernel,
        out_shape=jax.ShapeDtypeStruct((r_pad, cout_blk), jnp.float32),
        grid=(r_pad // tm,),
        in_specs=[
            pl.BlockSpec((tm, K), lambda i: (i, 0)),
            pl.BlockSpec((K, cout_blk), lambda i: (0, 0)),
            pl.BlockSpec((1, cout_blk), lambda i: (0, 0)),
            pl.BlockSpec((1, cout_blk), lambda i: (0, 0)),
        ],
        out_specs=pl.BlockSpec((tm, cout_blk), lambda i: (i, 0)),
        compiler_params=pltpu.CompilerParams(
            dimension_semantics=("parallel",),
            vmem_limit_bytes=vmem),
    )(x_col, w2, scale_p, shift_p)

    return out_flat[:R].reshape(N, H, W, cout_blk)


# --------------------------------------------------------------------------------------
# Public wrapper: KeepSizeConv2dLayer.forward (eval mode), NCHW in / NCHW out.
# --------------------------------------------------------------------------------------
def keep_size_conv2d_layer(x_nchw, weight, bias, gamma, beta,
                           running_mean, running_var, eps=1e-5, row_tile=1024):
    """x_nchw (N,Cin,H,W) f32, weight (Cout,Cin,3,3) f32 -> (N,Cout,H,W) f32."""
    N, Cin, H, W = x_nchw.shape
    Cout = weight.shape[0]

    # BN (eval) + conv bias folded into per-channel f32 scale/shift for the epilogue.
    inv_std = 1.0 / jnp.sqrt(running_var.astype(jnp.float32) + eps)
    scale = gamma.astype(jnp.float32) * inv_std
    shift = (bias.astype(jnp.float32) - running_mean.astype(jnp.float32)) * scale \
        + beta.astype(jnp.float32)

    # Output channel blocking: keep tiny Cout unpadded (masked stores, 16x less write
    # traffic at Cout=8); pad to 128 multiples only when Cout is large.
    cout_blk = Cout if Cout <= 64 else _round_up(Cout, 128)
    scale_p = jnp.pad(scale, (0, cout_blk - Cout)).reshape(1, cout_blk)
    shift_p = jnp.pad(shift, (0, cout_blk - Cout)).reshape(1, cout_blk)

    x_nhwc = jnp.transpose(x_nchw, (0, 2, 3, 1))                         # (N,H,W,Cin)
    w_taps = jnp.transpose(weight, (2, 3, 1, 0)).astype(jnp.float32)     # (3,3,Cin,Cout)

    use_tap_path = (Cin >= 16) and (W % 8 == 0)
    if use_tap_path:
        out_nhwc = _conv_tap_path(x_nhwc, w_taps, scale_p, shift_p, cout_blk, row_tile)
    else:
        out_nhwc = _conv_im2col_path(x_nhwc, w_taps, scale_p, shift_p, cout_blk, row_tile)

    if cout_blk != Cout:
        out_nhwc = out_nhwc[..., :Cout]
    return jnp.transpose(out_nhwc, (0, 3, 1, 2))                         # (N,Cout,H,W)


if __name__ == "__main__":
    def reference(x, weight, bias, gamma, beta, mean, var, eps=1e-5):
        cout = weight.shape[0]
        ref = jax.lax.conv_general_dilated(
            x, weight, (1, 1), "SAME",
            dimension_numbers=("NCHW", "OIHW", "NCHW"),
            precision=jax.lax.Precision.HIGHEST)
        ref = ref + bias.reshape(1, cout, 1, 1)
        ref = (ref - mean.reshape(1, cout, 1, 1)) / jnp.sqrt(var.reshape(1, cout, 1, 1) + eps)
        ref = ref * gamma.reshape(1, cout, 1, 1) + beta.reshape(1, cout, 1, 1)
        return jnp.maximum(ref, 0.0)

    key = jax.random.PRNGKey(0)
    # Config 1: module-suggested tiny shape (Cin=4 -> im2col fallback path).
    # Config 2: Cin=32 -> primary in-kernel 3x3 tap path.
    for (n, cin, h, w, cout) in [(2, 4, 16, 16, 8), (2, 32, 16, 16, 8)]:
        key, k_x, k_w, k_b, k_g = jax.random.split(key, 5)
        x = jax.random.normal(k_x, (n, cin, h, w), jnp.float32)

        fan_in = cin * 9
        bound = 1.0 / jnp.sqrt(fan_in)
        weight = jax.random.uniform(k_w, (cout, cin, 3, 3), jnp.float32, -bound, bound)
        bias = jax.random.uniform(k_b, (cout,), jnp.float32, -bound, bound)
        gamma = jax.random.uniform(k_g, (cout,), jnp.float32, 0.5, 1.5)
        beta = jnp.linspace(-0.2, 0.2, cout).astype(jnp.float32)
        running_mean = jnp.linspace(-0.1, 0.1, cout).astype(jnp.float32)
        running_var = jnp.linspace(0.5, 1.5, cout).astype(jnp.float32)

        out = keep_size_conv2d_layer(x, weight, bias, gamma, beta,
                                     running_mean, running_var)
        jax.block_until_ready(out)

        ref = reference(x, weight, bias, gamma, beta, running_mean, running_var)
        assert out.shape == ref.shape
        err = jnp.max(jnp.abs(out - ref))
        assert jnp.allclose(out, ref, atol=2e-2, rtol=2e-2), (
            f"cfg (N={n},Cin={cin},H={h},W={w},Cout={cout}): max abs err {err}")

    print("KERNEL_OK")
</pallas_src>

<mosaic_0001>
module attributes {stable_mosaic.version = 11 : i64} {
  func.func @_gemm_affine_relu_kernel(%arg0: i32, %arg1: memref<512x36xbf16, #tpu.memory_space<vmem>>, %arg2: memref<36x8xbf16, #tpu.memory_space<vmem>>, %arg3: memref<1x8xf32, #tpu.memory_space<vmem>>, %arg4: memref<1x8xf32, #tpu.memory_space<vmem>>, %arg5: memref<512x8xf32, #tpu.memory_space<vmem>>) attributes {dimension_semantics = [#tpu.dimension_semantics<parallel>], iteration_bounds = array<i64: 1>, scalar_prefetch = 0 : i64, scratch_operands = 0 : i64, tpu.core_type = #tpu.core_type<tc>, window_params = [{transform_indices = @transform_0, window_bounds = array<i64: 512, 36>}, {pipeline_mode = #tpu.pipeline_mode<synchronous>, transform_indices = @transform_1, window_bounds = array<i64: 36, 8>}, {pipeline_mode = #tpu.pipeline_mode<synchronous>, transform_indices = @transform_2, window_bounds = array<i64: 1, 8>}, {pipeline_mode = #tpu.pipeline_mode<synchronous>, transform_indices = @transform_3, window_bounds = array<i64: 1, 8>}, {transform_indices = @transform_4, window_bounds = array<i64: 512, 8>}]} {
    %c0 = arith.constant 0 : index
    %c0_0 = arith.constant 0 : index
    %0 = vector.load %arg1[%c0, %c0_0] : memref<512x36xbf16, #tpu.memory_space<vmem>>, vector<512x36xbf16>
    %c0_1 = arith.constant 0 : index
    %c0_2 = arith.constant 0 : index
    %1 = vector.load %arg2[%c0_1, %c0_2] : memref<36x8xbf16, #tpu.memory_space<vmem>>, vector<36x8xbf16>
    %cst = arith.constant dense<0.000000e+00> : vector<512x8xf32>
    %2 = tpu.matmul %0, %1, %cst {dimension_numbers = #tpu.dot_dimension_numbers<[1], [0], [0], [1], [0, 0, 1, 1], [], []>} : vector<512x36xbf16>, vector<36x8xbf16>, vector<512x8xf32> -> vector<512x8xf32>
    %c0_3 = arith.constant 0 : index
    %c0_4 = arith.constant 0 : index
    %3 = vector.load %arg3[%c0_3, %c0_4] : memref<1x8xf32, #tpu.memory_space<vmem>>, vector<1x8xf32>
    %4 = vector.broadcast %3 : vector<1x8xf32> to vector<512x8xf32>
    %5 = arith.mulf %2, %4 : vector<512x8xf32>
    %c0_5 = arith.constant 0 : index
    %c0_6 = arith.constant 0 : index
    %6 = vector.load %arg4[%c0_5, %c0_6] : memref<1x8xf32, #tpu.memory_space<vmem>>, vector<1x8xf32>
    %7 = vector.broadcast %6 : vector<1x8xf32> to vector<512x8xf32>
    %8 = arith.addf %5, %7 : vector<512x8xf32>
    %cst_7 = arith.constant 0.000000e+00 : f32
    %9 = vector.broadcast %cst_7 : f32 to vector<512x8xf32>
    %10 = arith.maximumf %8, %9 : vector<512x8xf32>
    %c0_8 = arith.constant 0 : index
    %c0_9 = arith.constant 0 : index
    %11 = vector.load %arg5[%c0_8, %c0_9] : memref<512x8xf32, #tpu.memory_space<vmem>>, vector<512x8xf32>
    tpu.vector_store %arg5[%c0_8, %c0_9], %10 {strides = array<i32>} : memref<512x8xf32, #tpu.memory_space<vmem>>, vector<512x8xf32>,
    return
  }
  func.func @transform_0(%arg0: i32) -> (i32, i32) {
    %c0_i32 = arith.constant 0 : i32
    %c0_i32_0 = arith.constant 0 : i32
    return %arg0, %c0_i32 : i32, i32
  }
  func.func @transform_1(%arg0: i32) -> (i32, i32) {
    %c0_i32 = arith.constant 0 : i32
    %c0_i32_0 = arith.constant 0 : i32
    %c0_i32_1 = arith.constant 0 : i32
    return %c0_i32, %c0_i32_0 : i32, i32
  }
  func.func @transform_2(%arg0: i32) -> (i32, i32) {
    %c0_i32 = arith.constant 0 : i32
    %c0_i32_0 = arith.constant 0 : i32
    %c0_i32_1 = arith.constant 0 : i32
    return %c0_i32, %c0_i32_0 : i32, i32
  }
  func.func @transform_3(%arg0: i32) -> (i32, i32) {
    %c0_i32 = arith.constant 0 : i32
    %c0_i32_0 = arith.constant 0 : i32
    %c0_i32_1 = arith.constant 0 : i32
    return %c0_i32, %c0_i32_0 : i32, i32
  }
  func.func @transform_4(%arg0: i32) -> (i32, i32) {
    %c0_i32 = arith.constant 0 : i32
    %c0_i32_0 = arith.constant 0 : i32
    return %arg0, %c0_i32 : i32, i32
  }
}

</mosaic_0001>

<llo_original>
// kernel: tpu_custom_call.1
$region0: #{tpu_custom_call.1}
  #allocation0 [shape = 'u32[]', space=smem, size = 0x4, offset = 0x4, fixed_abs, tag = 'smem constant byte address 0x4 - core index']
  #allocation1 [shape = 'u32[144,128]{1,0:T(1,128)}', space=vmem, size = 0x12000, scoped, tag = 'internal scratch']
  %s0 = inlined_call_operand.vmem [shape: bf16[512,36], index: 0, kind: input, shape index: {}]
  %s1 = inlined_call_operand.vmem [shape: bf16[36,8], index: 1, kind: input, shape index: {}]
  %s2 = inlined_call_operand.vmem [shape: f32[1,8], index: 2, kind: input, shape index: {}]
  %s3 = inlined_call_operand.vmem [shape: f32[1,8], index: 3, kind: input, shape index: {}]
  %s4 = inlined_call_operand.vmem [shape: f32[512,8], index: 4, kind: output, shape index: {}]
  %s5 = sld [smem:[#allocation0]]
  $region26: #{tpu_custom_call.1} parent=0
    _
  %s7 = ssub.s32 1, %s5
  %s8 = scalar_select 0, %s7, %s5
  // Predicated region
  $region2: #{tpu_custom_call.1} parent=0 // pred_check
    _
  $region3: #{tpu_custom_call.1} parent=0 // pred_check_branch
    %10 = sbr.rel (0) target = $region5
  $region4: #{tpu_custom_call.1} parent=0 // pred_region
    _
  $region5: #{tpu_custom_call.1} parent=0 // pred_fallthru
    _
  // Predicated region
  $region6: #{tpu_custom_call.1} parent=0 // pred_check
    _
  $region7: #{tpu_custom_call.1} parent=0 // pred_check_branch
    %12 = sbr.rel (0) target = $region9
  $region8: #{tpu_custom_call.1} parent=0 // pred_region
    _
  $region9: #{tpu_custom_call.1} parent=0 // pred_fallthru
    _
  // Predicated region
  $region10: #{tpu_custom_call.1} parent=0 // pred_check
    _
  $region11: #{tpu_custom_call.1} parent=0 // pred_check_branch
    %14 = sbr.rel (0) target = $region13
  $region12: #{tpu_custom_call.1} parent=0 // pred_region
    _
  $region13: #{tpu_custom_call.1} parent=0 // pred_fallthru
    _
  // Predicated region
  $region14: #{tpu_custom_call.1} parent=0 // pred_check
    _
  $region15: #{tpu_custom_call.1} parent=0 // pred_check_branch
    %16 = sbr.rel (0) target = $region17
  $region16: #{tpu_custom_call.1} parent=0 // pred_region
    _
  $region17: #{tpu_custom_call.1} parent=0 // pred_fallthru
    _
  %v18 = vld [vmem:[%s0] sm:$0xf]
  %v19 = vld [vmem:[%s0 + $0x4] sm:$0xf]
  %v20 = vld [vmem:[%s0 + $0x8] sm:$0xf]
  %v21 = vld [vmem:[%s0 + $0xc] sm:$0xf]
  %v22 = vld [vmem:[%s0 + $0x10] sm:$0xf]
  %v23 = vld [vmem:[%s0 + $0x14] sm:$0xf]
  %v24 = vld [vmem:[%s0 + $0x18] sm:$0xf]
  %v25 = vld [vmem:[%s0 + $0x1c] sm:$0xf]
  %v26 = vld [vmem:[%s0 + $0x20] sm:$0xf]
  %v27 = vld [vmem:[%s0 + $0x24] sm:$0xf]
  %v28 = vld [vmem:[%s0 + $0x28] sm:$0xf]
  %v29 = vld [vmem:[%s0 + $0x2c] sm:$0xf]
  %v30 = vld [vmem:[%s0 + $0x30] sm:$0xf]
  %v31 = vld [vmem:[%s0 + $0x34] sm:$0xf]
  %v32 = vld [vmem:[%s0 + $0x38] sm:$0xf]
  %v33 = vld [vmem:[%s0 + $0x3c] sm:$0xf]
  %v34 = vld [vmem:[%s0 + $0x40] sm:$0xf]
  %v35 = vld [vmem:[%s0 + $0x44] sm:$0xf]
  %v36 = vld [vmem:[%s0 + $0x48] sm:$0xf]
  %v37 = vld [vmem:[%s0 + $0x4c] sm:$0xf]
  %v38 = vld [vmem:[%s0 + $0x50] sm:$0xf]
  %v39 = vld [vmem:[%s0 + $0x54] sm:$0xf]
  %v40 = vld [vmem:[%s0 + $0x58] sm:$0xf]
  %v41 = vld [vmem:[%s0 + $0x5c] sm:$0xf]
  %v42 = vld [vmem:[%s0 + $0x60] sm:$0xf]
  %v43 = vld [vmem:[%s0 + $0x64] sm:$0xf]
  %v44 = vld [vmem:[%s0 + $0x68] sm:$0xf]
  %v45 = vld [vmem:[%s0 + $0x6c] sm:$0xf]
  %v46 = vld [vmem:[%s0 + $0x70] sm:$0xf]
  %v47 = vld [vmem:[%s0 + $0x74] sm:$0xf]
  %v48 = vld [vmem:[%s0 + $0x78] sm:$0xf]
  %v49 = vld [vmem:[%s0 + $0x7c] sm:$0xf]
  %v50 = vld [vmem:[%s0 + $0x80] sm:$0xf]
  %v51 = vld [vmem:[%s0 + $0x84] sm:$0xf]
  %v52 = vld [vmem:[%s0 + $0x88] sm:$0xf]
  %v53 = vld [vmem:[%s0 + $0x8c] sm:$0xf]
  %v54 = vld [vmem:[%s0 + $0x90] sm:$0xf]
  %v55 = vld [vmem:[%s0 + $0x94] sm:$0xf]
  %v56 = vld [vmem:[%s0 + $0x98] sm:$0xf]
  %v57 = vld [vmem:[%s0 + $0x9c] sm:$0xf]
  %v58 = vld [vmem:[%s0 + $0xa0] sm:$0xf]
  %v59 = vld [vmem:[%s0 + $0xa4] sm:$0xf]
  %v60 = vld [vmem:[%s0 + $0xa8] sm:$0xf]
  %v61 = vld [vmem:[%s0 + $0xac] sm:$0xf]
  %v62 = vld [vmem:[%s0 + $0xb0] sm:$0xf]
  %v63 = vld [vmem:[%s0 + $0xb4] sm:$0xf]
  %v64 = vld [vmem:[%s0 + $0xb8] sm:$0xf]
  %v65 = vld [vmem:[%s0 + $0xbc] sm:$0xf]
  %v66 = vld [vmem:[%s0 + $0xc0] sm:$0xf]
  %v67 = vld [vmem:[%s0 + $0xc4] sm:$0xf]
  %v68 = vld [vmem:[%s0 + $0xc8] sm:$0xf]
  %v69 = vld [vmem:[%s0 + $0xcc] sm:$0xf]
  %v70 = vld [vmem:[%s0 + $0xd0] sm:$0xf]
  %v71 = vld [vmem:[%s0 + $0xd4] sm:$0xf]
  %v72 = vld [vmem:[%s0 + $0xd8] sm:$0xf]
  %v73 = vld [vmem:[%s0 + $0xdc] sm:$0xf]
  %v74 = vld [vmem:[%s0 + $0xe0] sm:$0xf]
  %v75 = vld [vmem:[%s0 + $0xe4] sm:$0xf]
  %v76 = vld [vmem:[%s0 + $0xe8] sm:$0xf]
  %v77 = vld [vmem:[%s0 + $0xec] sm:$0xf]
  %v78 = vld [vmem:[%s0 + $0xf0] sm:$0xf]
  %v79 = vld [vmem:[%s0 + $0xf4] sm:$0xf]
  %v80 = vld [vmem:[%s0 + $0xf8] sm:$0xf]
  %v81 = vld [vmem:[%s0 + $0xfc] sm:$0xf]
  %v82 = vld [vmem:[%s1] sm:$0xf]
  %v83 = vld [vmem:[%s1 + $0x4] sm:$0xf]
  %v84 = vld [vmem:[%s1 + $0x8] sm:$0xf]
  %v85 = vld [vmem:[%s1 + $0xc] sm:$0xf]
  %v86 = vld [vmem:[%s1 + $0x10] sm:$0x3]
  %v151 = vunpack.c.l.b16 %v18
  %v152 = vunpack.c.l.b16 %v19
  %v153 = vunpack.c.l.b16 %v20
  %v154 = vunpack.c.l.b16 %v21
  %v155 = vunpack.c.l.b16 %v22
  %v156 = vunpack.c.l.b16 %v23
  %v157 = vunpack.c.l.b16 %v24
  %v158 = vunpack.c.l.b16 %v25
  %v159 = vunpack.c.l.b16 %v26
  %v160 = vunpack.c.l.b16 %v27
  %v161 = vunpack.c.l.b16 %v28
  %v162 = vunpack.c.l.b16 %v29
  %v163 = vunpack.c.l.b16 %v30
  %v164 = vunpack.c.l.b16 %v31
  %v165 = vunpack.c.l.b16 %v32
  %v166 = vunpack.c.l.b16 %v33
  %v167 = vunpack.c.l.b16 %v34
  %v168 = vunpack.c.l.b16 %v35
  %v169 = vunpack.c.l.b16 %v36
  %v170 = vunpack.c.l.b16 %v37
  %v171 = vunpack.c.l.b16 %v38
  %v172 = vunpack.c.l.b16 %v39
  %v173 = vunpack.c.l.b16 %v40
  %v174 = vunpack.c.l.b16 %v41
  %v175 = vunpack.c.l.b16 %v42
  %v176 = vunpack.c.l.b16 %v43
  %v177 = vunpack.c.l.b16 %v44
  %v178 = vunpack.c.l.b16 %v45
  %v179 = vunpack.c.l.b16 %v46
  %v180 = vunpack.c.l.b16 %v47
  %v181 = vunpack.c.l.b16 %v48
  %v182 = vunpack.c.l.b16 %v49
  %v183 = vunpack.c.l.b16 %v50
  %v184 = vunpack.c.l.b16 %v51
  %v185 = vunpack.c.l.b16 %v52
  %v186 = vunpack.c.l.b16 %v53
  %v187 = vunpack.c.l.b16 %v54
  %v188 = vunpack.c.l.b16 %v55
  %v189 = vunpack.c.l.b16 %v56
  %v190 = vunpack.c.l.b16 %v57
  %v191 = vunpack.c.l.b16 %v58
  %v192 = vunpack.c.l.b16 %v59
  %v193 = vunpack.c.l.b16 %v60
  %v194 = vunpack.c.l.b16 %v61
  %v195 = vunpack.c.l.b16 %v62
  %v196 = vunpack.c.l.b16 %v63
  %v197 = vunpack.c.l.b16 %v64
  %v198 = vunpack.c.l.b16 %v65
  %v199 = vunpack.c.l.b16 %v66
  %v200 = vunpack.c.l.b16 %v67
  %v201 = vunpack.c.l.b16 %v68
  %v202 = vunpack.c.l.b16 %v69
  %v203 = vunpack.c.l.b16 %v70
  %v204 = vunpack.c.l.b16 %v71
  %v205 = vunpack.c.l.b16 %v72
  %v206 = vunpack.c.l.b16 %v73
  %v207 = vunpack.c.l.b16 %v74
  %v208 = vunpack.c.l.b16 %v75
  %v209 = vunpack.c.l.b16 %v76
  %v210 = vunpack.c.l.b16 %v77
  %v211 = vunpack.c.l.b16 %v78
  %v212 = vunpack.c.l.b16 %v79
  %v213 = vunpack.c.l.b16 %v80
  %v214 = vunpack.c.l.b16 %v81
  %v215 = vpack.c.b16 %v152, %v151
  %v216 = vpack.c.b16 %v154, %v153
  %v217 = vpack.c.b16 %v156, %v155
  %v218 = vpack.c.b16 %v158, %v157
  %v219 = vpack.c.b16 %v160, %v159
  %v220 = vpack.c.b16 %v162, %v161
  %v221 = vpack.c.b16 %v164, %v163
  %v222 = vpack.c.b16 %v166, %v165
  %v223 = vpack.c.b16 %v168, %v167
  %v224 = vpack.c.b16 %v170, %v169
  %v225 = vpack.c.b16 %v172, %v171
  %v226 = vpack.c.b16 %v174, %v173
  %v227 = vpack.c.b16 %v176, %v175
  %v228 = vpack.c.b16 %v178, %v177
  %v229 = vpack.c.b16 %v180, %v179
  %v230 = vpack.c.b16 %v182, %v181
  %v231 = vpack.c.b16 %v184, %v183
  %v232 = vpack.c.b16 %v186, %v185
  %v233 = vpack.c.b16 %v188, %v187
  %v234 = vpack.c.b16 %v190, %v189
  %v235 = vpack.c.b16 %v192, %v191
  %v236 = vpack.c.b16 %v194, %v193
  %v237 = vpack.c.b16 %v196, %v195
  %v238 = vpack.c.b16 %v198, %v197
  %v239 = vpack.c.b16 %v200, %v199
  %v240 = vpack.c.b16 %v202, %v201
  %v241 = vpack.c.b16 %v204, %v203
  %v242 = vpack.c.b16 %v206, %v205
  %v243 = vpack.c.b16 %v208, %v207
  %v244 = vpack.c.b16 %v210, %v209
  %v245 = vpack.c.b16 %v212, %v211
  %v246 = vpack.c.b16 %v214, %v213
  %v252 = vunpack.c.l.b16 %v82
  %v253 = vunpack.c.l.b16 %v83
  %v254 = vunpack.c.l.b16 %v84
  %v255 = vunpack.c.l.b16 %v85
  %v256 = vunpack.c.l.b16 %v86
  %v257 = vpack.c.b16 %v253, %v252
  %v258 = vpack.c.b16 %v255, %v254
  %v259 = vpack.c.b16 %v256, %v256
  %vm262 = vcmask 293888
  %v264 = vsel %vm262, %v215, 0
  %v267 = vsel %vm262, %v216, 0
  %v270 = vsel %vm262, %v217, 0
  %v273 = vsel %vm262, %v218, 0
  %v276 = vsel %vm262, %v219, 0
  %v279 = vsel %vm262, %v220, 0
  %v282 = vsel %vm262, %v221, 0
  %v285 = vsel %vm262, %v222, 0
  %v288 = vsel %vm262, %v223, 0
  %v291 = vsel %vm262, %v224, 0
  %v294 = vsel %vm262, %v225, 0
  %v297 = vsel %vm262, %v226, 0
  %v300 = vsel %vm262, %v227, 0
  %v303 = vsel %vm262, %v228, 0
  %v306 = vsel %vm262, %v229, 0
  %v309 = vsel %vm262, %v230, 0
  %v312 = vsel %vm262, %v231, 0
  %v315 = vsel %vm262, %v232, 0
  %v318 = vsel %vm262, %v233, 0
  %v321 = vsel %vm262, %v234, 0
  %v324 = vsel %vm262, %v235, 0
  %v327 = vsel %vm262, %v236, 0
  %v330 = vsel %vm262, %v237, 0
  %v333 = vsel %vm262, %v238, 0
  %v336 = vsel %vm262, %v239, 0
  %v339 = vsel %vm262, %v240, 0
  %v342 = vsel %vm262, %v241, 0
  %v345 = vsel %vm262, %v242, 0
  %v348 = vsel %vm262, %v243, 0
  %v351 = vsel %vm262, %v244, 0
  %v354 = vsel %vm262, %v245, 0
  %v357 = vsel %vm262, %v246, 0
  %vm359 = vcmask 1041408
  %v361 = vsel %vm359, %v259, 0
  %363 = vmatprep.subr.bf16.mxu0 0
  %364 = vmatpush1.bf16.msra.mxu0 %v257
  %365 = vmatprep.subr.bf16.mxu0 0
  %366 = vmatpush1.bf16.msra.mxu0 %v258
  %367 = vmatprep.subr.bf16.mxu0 0
  %368 = vmatpush1.bf16.msra.mxu0 %v361
  %369 = vmatprep.subr.bf16.mxu0 0
  %370 = vmatpush1.bf16.msra.mxu0 0
  %371 = vmatprep.subr.bf16.mxu0 0
  %372 = vmatpush1.bf16.msra.mxu0 0
  %373 = vmatprep.subr.bf16.mxu0 0
  %374 = vmatpush1.bf16.msra.mxu0 0
  %375 = vmatprep.subr.bf16.mxu0 0
  %376 = vmatpush1.bf16.msra.mxu0 0
  %377 = vmatprep.subr.bf16.mxu0 0
  %378 = vmatpush1.bf16.msra.mxu0 0
  %379 = vmatprep.subr.bf16.mxu0 0
  %380 = vmatpush1.bf16.msra.mxu0 0
  %381 = vmatprep.subr.bf16.mxu0 0
  %382 = vmatpush1.bf16.msra.mxu0 0
  %383 = vmatprep.subr.bf16.mxu0 0
  %384 = vmatpush1.bf16.msra.mxu0 0
  %385 = vmatprep.subr.bf16.mxu0 0
  %386 = vmatpush1.bf16.msra.mxu0 0
  %387 = vmatprep.subr.bf16.mxu0 0
  %388 = vmatpush1.bf16.msra.mxu0 0
  %389 = vmatprep.subr.bf16.mxu0 0
  %390 = vmatpush1.bf16.msra.mxu0 0
  %391 = vmatprep.subr.bf16.mxu0 0
  %392 = vmatpush1.bf16.msra.mxu0 0
  %393 = vmatprep.subr.bf16.mxu0 0
  %394 = vmatpush1.bf16.msra.mxu0 0
  %395 = vmatprep.mubr.bf16.mxu0 0
  %396 = vmatmul.mubr.bf16.gmra.mrb[0].mxu0 %v264
  %v397 = vpop.f32.mrb[0].mxu0
  %v398 = vadd.f32 0.0, %v397
  %v399 = vpop.f32.mrb[0].mxu0
  %v400 = vpop.f32.mrb[0].mxu0
  %v401 = vadd.f32 0.0, %v400
  %v402 = vpop.f32.mrb[0].mxu0
  %403 = vmatprep.mubr.bf16.mxu0 0
  %404 = vmatmul.mubr.bf16.gmra.mrb[0].mxu0 %v267
  %v405 = vpop.f32.mrb[0].mxu0
  %v406 = vadd.f32 0.0, %v405
  %v407 = vpop.f32.mrb[0].mxu0
  %v408 = vpop.f32.mrb[0].mxu0
  %v409 = vadd.f32 0.0, %v408
  %v410 = vpop.f32.mrb[0].mxu0
  %411 = vmatprep.mubr.bf16.mxu0 0
  %412 = vmatmul.mubr.bf16.gmra.mrb[0].mxu0 %v270
  %v413 = vpop.f32.mrb[0].mxu0
  %v414 = vadd.f32 0.0, %v413
  %v415 = vpop.f32.mrb[0].mxu0
  %v416 = vpop.f32.mrb[0].mxu0
  %v417 = vadd.f32 0.0, %v416
  %v418 = vpop.f32.mrb[0].mxu0
  %419 = vmatprep.mubr.bf16.mxu0 0
  %420 = vmatmul.mubr.bf16.gmra.mrb[0].mxu0 %v273
  %v421 = vpop.f32.mrb[0].mxu0
  %v422 = vadd.f32 0.0, %v421
  %v423 = vpop.f32.mrb[0].mxu0
  %v424 = vpop.f32.mrb[0].mxu0
  %v425 = vadd.f32 0.0, %v424
  %v426 = vpop.f32.mrb[0].mxu0
  %427 = vmatprep.mubr.bf16.mxu0 0
  %428 = vmatmul.mubr.bf16.gmra.mrb[0].mxu0 %v276
  %v429 = vpop.f32.mrb[0].mxu0
  %v430 = vadd.f32 0.0, %v429
  %v431 = vpop.f32.mrb[0].mxu0
  %v432 = vpop.f32.mrb[0].mxu0
  %v433 = vadd.f32 0.0, %v432
  %v434 = vpop.f32.mrb[0].mxu0
  %435 = vmatprep.mubr.bf16.mxu0 0
  %436 = vmatmul.mubr.bf16.gmra.mrb[0].mxu0 %v279
  %v437 = vpop.f32.mrb[0].mxu0
  %v438 = vadd.f32 0.0, %v437
  %v439 = vpop.f32.mrb[0].mxu0
  %v440 = vpop.f32.mrb[0].mxu0
  %v441 = vadd.f32 0.0, %v440
  %v442 = vpop.f32.mrb[0].mxu0
  %443 = vmatprep.mubr.bf16.mxu0 0
  %444 = vmatmul.mubr.bf16.gmra.mrb[0].mxu0 %v282
  %v445 = vpop.f32.mrb[0].mxu0
  %v446 = vadd.f32 0.0, %v445
  %v447 = vpop.f32.mrb[0].mxu0
  %v448 = vpop.f32.mrb[0].mxu0
  %v449 = vadd.f32 0.0, %v448
  %v450 = vpop.f32.mrb[0].mxu0
  %451 = vmatprep.mubr.bf16.mxu0 0
  %452 = vmatmul.mubr.bf16.gmra.mrb[0].mxu0 %v285
  %v453 = vpop.f32.mrb[0].mxu0
  %v454 = vadd.f32 0.0, %v453
  %v455 = vpop.f32.mrb[0].mxu0
  %v456 = vpop.f32.mrb[0].mxu0
  %v457 = vadd.f32 0.0, %v456
  %v458 = vpop.f32.mrb[0].mxu0
  %459 = vmatprep.mubr.bf16.mxu0 0
  %460 = vmatmul.mubr.bf16.gmra.mrb[0].mxu0 %v288
  %v461 = vpop.f32.mrb[0].mxu0
  %v462 = vadd.f32 0.0, %v461
  %v463 = vpop.f32.mrb[0].mxu0
  %v464 = vpop.f32.mrb[0].mxu0
  %v465 = vadd.f32 0.0, %v464
  %v466 = vpop.f32.mrb[0].mxu0
  %467 = vmatprep.mubr.bf16.mxu0 0
  %468 = vmatmul.mubr.bf16.gmra.mrb[0].mxu0 %v291
  %v469 = vpop.f32.mrb[0].mxu0
  %v470 = vadd.f32 0.0, %v469
  %v471 = vpop.f32.mrb[0].mxu0
  %v472 = vpop.f32.mrb[0].mxu0
  %v473 = vadd.f32 0.0, %v472
  %v474 = vpop.f32.mrb[0].mxu0
  %475 = vmatprep.mubr.bf16.mxu0 0
  %476 = vmatmul.mubr.bf16.gmra.mrb[0].mxu0 %v294
  %v477 = vpop.f32.mrb[0].mxu0
  %v478 = vadd.f32 0.0, %v477
  %v479 = vpop.f32.mrb[0].mxu0
  %v480 = vpop.f32.mrb[0].mxu0
  %v481 = vadd.f32 0.0, %v480
  %v482 = vpop.f32.mrb[0].mxu0
  %483 = vmatprep.mubr.bf16.mxu0 0
  %484 = vmatmul.mubr.bf16.gmra.mrb[0].mxu0 %v297
  %v485 = vpop.f32.mrb[0].mxu0
  %v486 = vadd.f32 0.0, %v485
  %v487 = vpop.f32.mrb[0].mxu0
  %v488 = vpop.f32.mrb[0].mxu0
  %v489 = vadd.f32 0.0, %v488
  %v490 = vpop.f32.mrb[0].mxu0
  %491 = vmatprep.mubr.bf16.mxu0 0
  %492 = vmatmul.mubr.bf16.gmra.mrb[0].mxu0 %v300
  %v493 = vpop.f32.mrb[0].mxu0
  %v494 = vadd.f32 0.0, %v493
  %v495 = vpop.f32.mrb[0].mxu0
  %v496 = vpop.f32.mrb[0].mxu0
  %v497 = vadd.f32 0.0, %v496
  %v498 = vpop.f32.mrb[0].mxu0
  %499 = vmatprep.mubr.bf16.mxu0 0
  %500 = vmatmul.mubr.bf16.gmra.mrb[0].mxu0 %v303
  %v501 = vpop.f32.mrb[0].mxu0
  %v502 = vadd.f32 0.0, %v501
  %v503 = vpop.f32.mrb[0].mxu0
  %v504 = vpop.f32.mrb[0].mxu0
  %v505 = vadd.f32 0.0, %v504
  %v506 = vpop.f32.mrb[0].mxu0
  %507 = vmatprep.mubr.bf16.mxu0 0
  %508 = vmatmul.mubr.bf16.gmra.mrb[0].mxu0 %v306
  %v509 = vpop.f32.mrb[0].mxu0
  %v510 = vadd.f32 0.0, %v509
  %v511 = vpop.f32.mrb[0].mxu0
  %v512 = vpop.f32.mrb[0].mxu0
  %v513 = vadd.f32 0.0, %v512
  %v514 = vpop.f32.mrb[0].mxu0
  %515 = vmatprep.mubr.bf16.mxu0 0
  %516 = vmatmul.mubr.bf16.gmra.mrb[0].mxu0 %v309
  %v517 = vpop.f32.mrb[0].mxu0
  %v518 = vadd.f32 0.0, %v517
  %v519 = vpop.f32.mrb[0].mxu0
  %v520 = vpop.f32.mrb[0].mxu0
  %v521 = vadd.f32 0.0, %v520
  %v522 = vpop.f32.mrb[0].mxu0
  %523 = vmatprep.mubr.bf16.mxu0 0
  %524 = vmatmul.mubr.bf16.gmra.mrb[0].mxu0 %v312
  %v525 = vpop.f32.mrb[0].mxu0
  %v526 = vadd.f32 0.0, %v525
  %v527 = vpop.f32.mrb[0].mxu0
  %v528 = vpop.f32.mrb[0].mxu0
  %v529 = vadd.f32 0.0, %v528
  %v530 = vpop.f32.mrb[0].mxu0
  %531 = vmatprep.mubr.bf16.mxu0 0
  %532 = vmatmul.mubr.bf16.gmra.mrb[0].mxu0 %v315
  %v533 = vpop.f32.mrb[0].mxu0
  %v534 = vadd.f32 0.0, %v533
  %v535 = vpop.f32.mrb[0].mxu0
  %v536 = vpop.f32.mrb[0].mxu0
  %v537 = vadd.f32 0.0, %v536
  %v538 = vpop.f32.mrb[0].mxu0
  %539 = vmatprep.mubr.bf16.mxu0 0
  %540 = vmatmul.mubr.bf16.gmra.mrb[0].mxu0 %v318
  %v541 = vpop.f32.mrb[0].mxu0
  %v542 = vadd.f32 0.0, %v541
  %v543 = vpop.f32.mrb[0].mxu0
  %v544 = vpop.f32.mrb[0].mxu0
  %v545 = vadd.f32 0.0, %v544
  %v546 = vpop.f32.mrb[0].mxu0
  %547 = vmatprep.mubr.bf16.mxu0 0
  %548 = vmatmul.mubr.bf16.gmra.mrb[0].mxu0 %v321
  %v549 = vpop.f32.mrb[0].mxu0
  %v550 = vadd.f32 0.0, %v549
  %v551 = vpop.f32.mrb[0].mxu0
  %v552 = vpop.f32.mrb[0].mxu0
  %v553 = vadd.f32 0.0, %v552
  %v554 = vpop.f32.mrb[0].mxu0
  %555 = vmatprep.mubr.bf16.mxu0 0
  %556 = vmatmul.mubr.bf16.gmra.mrb[0].mxu0 %v324
  %v557 = vpop.f32.mrb[0].mxu0
  %v558 = vadd.f32 0.0, %v557
  %v559 = vpop.f32.mrb[0].mxu0
  %v560 = vpop.f32.mrb[0].mxu0
  %v561 = vadd.f32 0.0, %v560
  %v562 = vpop.f32.mrb[0].mxu0
  %563 = vmatprep.mubr.bf16.mxu0 0
  %564 = vmatmul.mubr.bf16.gmra.mrb[0].mxu0 %v327
  %v565 = vpop.f32.mrb[0].mxu0
  %v566 = vadd.f32 0.0, %v565
  %v567 = vpop.f32.mrb[0].mxu0
  %v568 = vpop.f32.mrb[0].mxu0
  %v569 = vadd.f32 0.0, %v568
  %v570 = vpop.f32.mrb[0].mxu0
  %571 = vmatprep.mubr.bf16.mxu0 0
  %572 = vmatmul.mubr.bf16.gmra.mrb[0].mxu0 %v330
  %v573 = vpop.f32.mrb[0].mxu0
  %v574 = vadd.f32 0.0, %v573
  %v575 = vpop.f32.mrb[0].mxu0
  %v576 = vpop.f32.mrb[0].mxu0
  %v577 = vadd.f32 0.0, %v576
  %v578 = vpop.f32.mrb[0].mxu0
  %579 = vmatprep.mubr.bf16.mxu0 0
  %580 = vmatmul.mubr.bf16.gmra.mrb[0].mxu0 %v333
  %v581 = vpop.f32.mrb[0].mxu0
  %v582 = vadd.f32 0.0, %v581
  %v583 = vpop.f32.mrb[0].mxu0
  %v584 = vpop.f32.mrb[0].mxu0
  %v585 = vadd.f32 0.0, %v584
  %v586 = vpop.f32.mrb[0].mxu0
  %587 = vmatprep.mubr.bf16.mxu0 0
  %588 = vmatmul.mubr.bf16.gmra.mrb[0].mxu0 %v336
  %v589 = vpop.f32.mrb[0].mxu0
  %v590 = vadd.f32 0.0, %v589
  %v591 = vpop.f32.mrb[0].mxu0
  %v592 = vpop.f32.mrb[0].mxu0
  %v593 = vadd.f32 0.0, %v592
  %v594 = vpop.f32.mrb[0].mxu0
  %595 = vmatprep.mubr.bf16.mxu0 0
  %596 = vmatmul.mubr.bf16.gmra.mrb[0].mxu0 %v339
  %v597 = vpop.f32.mrb[0].mxu0
  %v598 = vadd.f32 0.0, %v597
  %v599 = vpop.f32.mrb[0].mxu0
  %v600 = vpop.f32.mrb[0].mxu0
  %v601 = vadd.f32 0.0, %v600
  %v602 = vpop.f32.mrb[0].mxu0
  %603 = vmatprep.mubr.bf16.mxu0 0
  %604 = vmatmul.mubr.bf16.gmra.mrb[0].mxu0 %v342
  %v605 = vpop.f32.mrb[0].mxu0
  %v606 = vadd.f32 0.0, %v605
  %v607 = vpop.f32.mrb[0].mxu0
  %v608 = vpop.f32.mrb[0].mxu0
  %v609 = vadd.f32 0.0, %v608
  %v610 = vpop.f32.mrb[0].mxu0
  %611 = vmatprep.mubr.bf16.mxu0 0
  %612 = vmatmul.mubr.bf16.gmra.mrb[0].mxu0 %v345
  %v613 = vpop.f32.mrb[0].mxu0
  %v614 = vadd.f32 0.0, %v613
  %v615 = vpop.f32.mrb[0].mxu0
  %v616 = vpop.f32.mrb[0].mxu0
  %v617 = vadd.f32 0.0, %v616
  %v618 = vpop.f32.mrb[0].mxu0
  %619 = vmatprep.mubr.bf16.mxu0 0
  %620 = vmatmul.mubr.bf16.gmra.mrb[0].mxu0 %v348
  %v621 = vpop.f32.mrb[0].mxu0
  %v622 = vadd.f32 0.0, %v621
  %v623 = vpop.f32.mrb[0].mxu0
  %v624 = vpop.f32.mrb[0].mxu0
  %v625 = vadd.f32 0.0, %v624
  %v626 = vpop.f32.mrb[0].mxu0
  %627 = vmatprep.mubr.bf16.mxu0 0
  %628 = vmatmul.mubr.bf16.gmra.mrb[0].mxu0 %v351
  %v629 = vpop.f32.mrb[0].mxu0
  %v630 = vadd.f32 0.0, %v629
  %v631 = vpop.f32.mrb[0].mxu0
  %v632 = vpop.f32.mrb[0].mxu0
  %v633 = vadd.f32 0.0, %v632
  %v634 = vpop.f32.mrb[0].mxu0
  %635 = vmatprep.mubr.bf16.mxu0 0
  %636 = vmatmul.mubr.bf16.gmra.mrb[0].mxu0 %v354
  %v637 = vpop.f32.mrb[0].mxu0
  %v638 = vadd.f32 0.0, %v637
  %v639 = vpop.f32.mrb[0].mxu0
  %v640 = vpop.f32.mrb[0].mxu0
  %v641 = vadd.f32 0.0, %v640
  %v642 = vpop.f32.mrb[0].mxu0
  %643 = vmatprep.mubr.bf16.mxu0 0
  %644 = vmatmul.mubr.bf16.gmra.mrb[0].mxu0 %v357
  %v645 = vpop.f32.mrb[0].mxu0
  %v646 = vadd.f32 0.0, %v645
  %v647 = vpop.f32.mrb[0].mxu0
  %v648 = vpop.f32.mrb[0].mxu0
  %v649 = vadd.f32 0.0, %v648
  %v650 = vpop.f32.mrb[0].mxu0
  %651 = vdwg.mxu0
  %v652 = vld [vmem:[%s2] sm:$0x1]
  %v654 = vlaneseq
  %v655 = vshrl.u32 %v654, 7
  %v656 = vsub.s32 0, %v655
  %v657 = vrot.slane %v652, %v656
  %v659 = vmul.f32 %v398, %v657
  %v660 = vmul.f32 %v401, %v657
  %v661 = vmul.f32 %v406, %v657
  %v662 = vmul.f32 %v409, %v657
  %v663 = vmul.f32 %v414, %v657
  %v664 = vmul.f32 %v417, %v657
  %v665 = vmul.f32 %v422, %v657
  %v666 = vmul.f32 %v425, %v657
  %v667 = vmul.f32 %v430, %v657
  %v668 = vmul.f32 %v433, %v657
  %v669 = vmul.f32 %v438, %v657
  %v670 = vmul.f32 %v441, %v657
  %v671 = vmul.f32 %v446, %v657
  %v672 = vmul.f32 %v449, %v657
  %v673 = vmul.f32 %v454, %v657
  %v674 = vmul.f32 %v457, %v657
  %v675 = vmul.f32 %v462, %v657
  %v676 = vmul.f32 %v465, %v657
  %v677 = vmul.f32 %v470, %v657
  %v678 = vmul.f32 %v473, %v657
  %v679 = vmul.f32 %v478, %v657
  %v680 = vmul.f32 %v481, %v657
  %v681 = vmul.f32 %v486, %v657
  %v682 = vmul.f32 %v489, %v657
  %v683 = vmul.f32 %v494, %v657
  %v684 = vmul.f32 %v497, %v657
  %v685 = vmul.f32 %v502, %v657
  %v686 = vmul.f32 %v505, %v657
  %v687 = vmul.f32 %v510, %v657
  %v688 = vmul.f32 %v513, %v657
  %v689 = vmul.f32 %v518, %v657
  %v690 = vmul.f32 %v521, %v657
  %v691 = vmul.f32 %v526, %v657
  %v692 = vmul.f32 %v529, %v657
  %v693 = vmul.f32 %v534, %v657
  %v694 = vmul.f32 %v537, %v657
  %v695 = vmul.f32 %v542, %v657
  %v696 = vmul.f32 %v545, %v657
  %v697 = vmul.f32 %v550, %v657
  %v698 = vmul.f32 %v553, %v657
  %v699 = vmul.f32 %v558, %v657
  %v700 = vmul.f32 %v561, %v657
  %v701 = vmul.f32 %v566, %v657
  %v702 = vmul.f32 %v569, %v657
  %v703 = vmul.f32 %v574, %v657
  %v704 = vmul.f32 %v577, %v657
  %v705 = vmul.f32 %v582, %v657
  %v706 = vmul.f32 %v585, %v657
  %v707 = vmul.f32 %v590, %v657
  %v708 = vmul.f32 %v593, %v657
  %v709 = vmul.f32 %v598, %v657
  %v710 = vmul.f32 %v601, %v657
  %v711 = vmul.f32 %v606, %v657
  %v712 = vmul.f32 %v609, %v657
  %v713 = vmul.f32 %v614, %v657
  %v714 = vmul.f32 %v617, %v657
  %v715 = vmul.f32 %v622, %v657
  %v716 = vmul.f32 %v625, %v657
  %v717 = vmul.f32 %v630, %v657
  %v718 = vmul.f32 %v633, %v657
  %v719 = vmul.f32 %v638, %v657
  %v720 = vmul.f32 %v641, %v657
  %v721 = vmul.f32 %v646, %v657
  %v722 = vmul.f32 %v649, %v657
  %v723 = vld [vmem:[%s3] sm:$0x1]
  %v725 = vlaneseq
  %v726 = vshrl.u32 %v725, 7
  %v727 = vsub.s32 0, %v726
  %v728 = vrot.slane %v723, %v727
  %v730 = vadd.f32 %v659, %v728
  %v731 = vadd.f32 %v660, %v728
  %v732 = vadd.f32 %v661, %v728
  %v733 = vadd.f32 %v662, %v728
  %v734 = vadd.f32 %v663, %v728
  %v735 = vadd.f32 %v664, %v728
  %v736 = vadd.f32 %v665, %v728
  %v737 = vadd.f32 %v666, %v728
  %v738 = vadd.f32 %v667, %v728
  %v739 = vadd.f32 %v668, %v728
  %v740 = vadd.f32 %v669, %v728
  %v741 = vadd.f32 %v670, %v728
  %v742 = vadd.f32 %v671, %v728
  %v743 = vadd.f32 %v672, %v728
  %v744 = vadd.f32 %v673, %v728
  %v745 = vadd.f32 %v674, %v728
  %v746 = vadd.f32 %v675, %v728
  %v747 = vadd.f32 %v676, %v728
  %v748 = vadd.f32 %v677, %v728
  %v749 = vadd.f32 %v678, %v728
  %v750 = vadd.f32 %v679, %v728
  %v751 = vadd.f32 %v680, %v728
  %v752 = vadd.f32 %v681, %v728
  %v753 = vadd.f32 %v682, %v728
  %v754 = vadd.f32 %v683, %v728
  %v755 = vadd.f32 %v684, %v728
  %v756 = vadd.f32 %v685, %v728
  %v757 = vadd.f32 %v686, %v728
  %v758 = vadd.f32 %v687, %v728
  %v759 = vadd.f32 %v688, %v728
  %v760 = vadd.f32 %v689, %v728
  %v761 = vadd.f32 %v690, %v728
  %v762 = vadd.f32 %v691, %v728
  %v763 = vadd.f32 %v692, %v728
  %v764 = vadd.f32 %v693, %v728
  %v765 = vadd.f32 %v694, %v728
  %v766 = vadd.f32 %v695, %v728
  %v767 = vadd.f32 %v696, %v728
  %v768 = vadd.f32 %v697, %v728
  %v769 = vadd.f32 %v698, %v728
  %v770 = vadd.f32 %v699, %v728
  %v771 = vadd.f32 %v700, %v728
  %v772 = vadd.f32 %v701, %v728
  %v773 = vadd.f32 %v702, %v728
  %v774 = vadd.f32 %v703, %v728
  %v775 = vadd.f32 %v704, %v728
  %v776 = vadd.f32 %v705, %v728
  %v777 = vadd.f32 %v706, %v728
  %v778 = vadd.f32 %v707, %v728
  %v779 = vadd.f32 %v708, %v728
  %v780 = vadd.f32 %v709, %v728
  %v781 = vadd.f32 %v710, %v728
  %v782 = vadd.f32 %v711, %v728
  %v783 = vadd.f32 %v712, %v728
  %v784 = vadd.f32 %v713, %v728
  %v785 = vadd.f32 %v714, %v728
  %v786 = vadd.f32 %v715, %v728
  %v787 = vadd.f32 %v716, %v728
  %v788 = vadd.f32 %v717, %v728
  %v789 = vadd.f32 %v718, %v728
  %v790 = vadd.f32 %v719, %v728
  %v791 = vadd.f32 %v720, %v728
  %v792 = vadd.f32 %v721, %v728
  %v793 = vadd.f32 %v722, %v728
  %v794 = vmax.f32 %v730, 0.0
  %v795 = vmax.f32 %v731, 0.0
  %v796 = vmax.f32 %v732, 0.0
  %v797 = vmax.f32 %v733, 0.0
  %v798 = vmax.f32 %v734, 0.0
  %v799 = vmax.f32 %v735, 0.0
  %v800 = vmax.f32 %v736, 0.0
  %v801 = vmax.f32 %v737, 0.0
  %v802 = vmax.f32 %v738, 0.0
  %v803 = vmax.f32 %v739, 0.0
  %v804 = vmax.f32 %v740, 0.0
  %v805 = vmax.f32 %v741, 0.0
  %v806 = vmax.f32 %v742, 0.0
  %v807 = vmax.f32 %v743, 0.0
  %v808 = vmax.f32 %v744, 0.0
  %v809 = vmax.f32 %v745, 0.0
  %v810 = vmax.f32 %v746, 0.0
  %v811 = vmax.f32 %v747, 0.0
  %v812 = vmax.f32 %v748, 0.0
  %v813 = vmax.f32 %v749, 0.0
  %v814 = vmax.f32 %v750, 0.0
  %v815 = vmax.f32 %v751, 0.0
  %v816 = vmax.f32 %v752, 0.0
  %v817 = vmax.f32 %v753, 0.0
  %v818 = vmax.f32 %v754, 0.0
  %v819 = vmax.f32 %v755, 0.0
  %v820 = vmax.f32 %v756, 0.0
  %v821 = vmax.f32 %v757, 0.0
  %v822 = vmax.f32 %v758, 0.0
  %v823 = vmax.f32 %v759, 0.0
  %v824 = vmax.f32 %v760, 0.0
  %v825 = vmax.f32 %v761, 0.0
  %v826 = vmax.f32 %v762, 0.0
  %v827 = vmax.f32 %v763, 0.0
  %v828 = vmax.f32 %v764, 0.0
  %v829 = vmax.f32 %v765, 0.0
  %v830 = vmax.f32 %v766, 0.0
  %v831 = vmax.f32 %v767, 0.0
  %v832 = vmax.f32 %v768, 0.0
  %v833 = vmax.f32 %v769, 0.0
  %v834 = vmax.f32 %v770, 0.0
  %v835 = vmax.f32 %v771, 0.0
  %v836 = vmax.f32 %v772, 0.0
  %v837 = vmax.f32 %v773, 0.0
  %v838 = vmax.f32 %v774, 0.0
  %v839 = vmax.f32 %v775, 0.0
  %v840 = vmax.f32 %v776, 0.0
  %v841 = vmax.f32 %v777, 0.0
  %v842 = vmax.f32 %v778, 0.0
  %v843 = vmax.f32 %v779, 0.0
  %v844 = vmax.f32 %v780, 0.0
  %v845 = vmax.f32 %v781, 0.0
  %v846 = vmax.f32 %v782, 0.0
  %v847 = vmax.f32 %v783, 0.0
  %v848 = vmax.f32 %v784, 0.0
  %v849 = vmax.f32 %v785, 0.0
  %v850 = vmax.f32 %v786, 0.0
  %v851 = vmax.f32 %v787, 0.0
  %v852 = vmax.f32 %v788, 0.0
  %v853 = vmax.f32 %v789, 0.0
  %v854 = vmax.f32 %v790, 0.0
  %v855 = vmax.f32 %v791, 0.0
  %v856 = vmax.f32 %v792, 0.0
  %v857 = vmax.f32 %v793, 0.0
  %vm858 = vcmask 64512
  %859 = vst.msk [vmem:[%s4] sm:$0xff] %vm858, %v794
  %860 = vst.msk [vmem:[%s4 + $0x8] sm:$0xff] %vm858, %v795
  %861 = vst.msk [vmem:[%s4 + $0x10] sm:$0xff] %vm858, %v796
  %862 = vst.msk [vmem:[%s4 + $0x18] sm:$0xff] %vm858, %v797
  %863 = vst.msk [vmem:[%s4 + $0x20] sm:$0xff] %vm858, %v798
  %864 = vst.msk [vmem:[%s4 + $0x28] sm:$0xff] %vm858, %v799
  %865 = vst.msk [vmem:[%s4 + $0x30] sm:$0xff] %vm858, %v800
  %866 = vst.msk [vmem:[%s4 + $0x38] sm:$0xff] %vm858, %v801
  %867 = vst.msk [vmem:[%s4 + $0x40] sm:$0xff] %vm858, %v802
  %868 = vst.msk [vmem:[%s4 + $0x48] sm:$0xff] %vm858, %v803
  %869 = vst.msk [vmem:[%s4 + $0x50] sm:$0xff] %vm858, %v804
  %870 = vst.msk [vmem:[%s4 + $0x58] sm:$0xff] %vm858, %v805
  %871 = vst.msk [vmem:[%s4 + $0x60] sm:$0xff] %vm858, %v806
  %872 = vst.msk [vmem:[%s4 + $0x68] sm:$0xff] %vm858, %v807
  %873 = vst.msk [vmem:[%s4 + $0x70] sm:$0xff] %vm858, %v808
  %874 = vst.msk [vmem:[%s4 + $0x78] sm:$0xff] %vm858, %v809
  %875 = vst.msk [vmem:[%s4 + $0x80] sm:$0xff] %vm858, %v810
  %876 = vst.msk [vmem:[%s4 + $0x88] sm:$0xff] %vm858, %v811
  %877 = vst.msk [vmem:[%s4 + $0x90] sm:$0xff] %vm858, %v812
  %878 = vst.msk [vmem:[%s4 + $0x98] sm:$0xff] %vm858, %v813
  %879 = vst.msk [vmem:[%s4 + $0xa0] sm:$0xff] %vm858, %v814
  %880 = vst.msk [vmem:[%s4 + $0xa8] sm:$0xff] %vm858, %v815
  %881 = vst.msk [vmem:[%s4 + $0xb0] sm:$0xff] %vm858, %v816
  %882 = vst.msk [vmem:[%s4 + $0xb8] sm:$0xff] %vm858, %v817
  %883 = vst.msk [vmem:[%s4 + $0xc0] sm:$0xff] %vm858, %v818
  %884 = vst.msk [vmem:[%s4 + $0xc8] sm:$0xff] %vm858, %v819
  %885 = vst.msk [vmem:[%s4 + $0xd0] sm:$0xff] %vm858, %v820
  %886 = vst.msk [vmem:[%s4 + $0xd8] sm:$0xff] %vm858, %v821
  %887 = vst.msk [vmem:[%s4 + $0xe0] sm:$0xff] %vm858, %v822
  %888 = vst.msk [vmem:[%s4 + $0xe8] sm:$0xff] %vm858, %v823
  %889 = vst.msk [vmem:[%s4 + $0xf0] sm:$0xff] %vm858, %v824
  %890 = vst.msk [vmem:[%s4 + $0xf8] sm:$0xff] %vm858, %v825
  %891 = vst.msk [vmem:[%s4 + $0x100] sm:$0xff] %vm858, %v826
  %892 = vst.msk [vmem:[%s4 + $0x108] sm:$0xff] %vm858, %v827
  %893 = vst.msk [vmem:[%s4 + $0x110] sm:$0xff] %vm858, %v828
  %894 = vst.msk [vmem:[%s4 + $0x118] sm:$0xff] %vm858, %v829
  %895 = vst.msk [vmem:[%s4 + $0x120] sm:$0xff] %vm858, %v830
  %896 = vst.msk [vmem:[%s4 + $0x128] sm:$0xff] %vm858, %v831
  %897 = vst.msk [vmem:[%s4 + $0x130] sm:$0xff] %vm858, %v832
  %898 = vst.msk [vmem:[%s4 + $0x138] sm:$0xff] %vm858, %v833
  %899 = vst.msk [vmem:[%s4 + $0x140] sm:$0xff] %vm858, %v834
  %900 = vst.msk [vmem:[%s4 + $0x148] sm:$0xff] %vm858, %v835
  %901 = vst.msk [vmem:[%s4 + $0x150] sm:$0xff] %vm858, %v836
  %902 = vst.msk [vmem:[%s4 + $0x158] sm:$0xff] %vm858, %v837
  %903 = vst.msk [vmem:[%s4 + $0x160] sm:$0xff] %vm858, %v838
  %904 = vst.msk [vmem:[%s4 + $0x168] sm:$0xff] %vm858, %v839
  %905 = vst.msk [vmem:[%s4 + $0x170] sm:$0xff] %vm858, %v840
  %906 = vst.msk [vmem:[%s4 + $0x178] sm:$0xff] %vm858, %v841
  %907 = vst.msk [vmem:[%s4 + $0x180] sm:$0xff] %vm858, %v842
  %908 = vst.msk [vmem:[%s4 + $0x188] sm:$0xff] %vm858, %v843
  %909 = vst.msk [vmem:[%s4 + $0x190] sm:$0xff] %vm858, %v844
  %910 = vst.msk [vmem:[%s4 + $0x198] sm:$0xff] %vm858, %v845
  %911 = vst.msk [vmem:[%s4 + $0x1a0] sm:$0xff] %vm858, %v846
  %912 = vst.msk [vmem:[%s4 + $0x1a8] sm:$0xff] %vm858, %v847
  %913 = vst.msk [vmem:[%s4 + $0x1b0] sm:$0xff] %vm858, %v848
  %914 = vst.msk [vmem:[%s4 + $0x1b8] sm:$0xff] %vm858, %v849
  %915 = vst.msk [vmem:[%s4 + $0x1c0] sm:$0xff] %vm858, %v850
  %916 = vst.msk [vmem:[%s4 + $0x1c8] sm:$0xff] %vm858, %v851
  %917 = vst.msk [vmem:[%s4 + $0x1d0] sm:$0xff] %vm858, %v852
  %918 = vst.msk [vmem:[%s4 + $0x1d8] sm:$0xff] %vm858, %v853
  %919 = vst.msk [vmem:[%s4 + $0x1e0] sm:$0xff] %vm858, %v854
  %920 = vst.msk [vmem:[%s4 + $0x1e8] sm:$0xff] %vm858, %v855
  %921 = vst.msk [vmem:[%s4 + $0x1f0] sm:$0xff] %vm858, %v856
  %922 = vst.msk [vmem:[%s4 + $0x1f8] sm:$0xff] %vm858, %v857
  // Predicated region
  $region18: #{tpu_custom_call.1} parent=0 // pred_check
    _
  $region19: #{tpu_custom_call.1} parent=0 // pred_check_branch
    %924 = sbr.rel (0) target = $region21
  $region20: #{tpu_custom_call.1} parent=0 // pred_region
    _
  $region21: #{tpu_custom_call.1} parent=0 // pred_fallthru
    _
  // Predicated region
  $region22: #{tpu_custom_call.1} parent=0 // pred_check
    _
  $region23: #{tpu_custom_call.1} parent=0 // pred_check_branch
    %926 = sbr.rel (0) target = $region25
  $region24: #{tpu_custom_call.1} parent=0 // pred_region
    _
  $region25: #{tpu_custom_call.1} parent=0 // pred_fallthru
    _

</llo_original>
